<compile_context>
chip_gen: v5e
topology: v5e:2x2
jax: 0.10.0
libtpu: 0.0.40
codegen_flags: <defaults>
</compile_context>

<pallas_src>
import jax
import jax.numpy as jnp
from jax import lax
from jax.experimental import pallas as pl
from jax.experimental.pallas import tpu as pltpu


def reward_predictor_kernel(x_ref, w1_ref, b1_ref, w2_ref, b2_ref,
                            w3_ref, b3_ref, out_ref):
    # In-kernel cast to bf16 (VPU, hidden under MXU work); no wrapper pass over x.
    x = x_ref[...].astype(jnp.bfloat16)                            # [TILE_B, D] bf16
    # fc1 (bf16 MXU, f32 accumulate) + bias + ReLU in f32
    h1 = jnp.dot(x, w1_ref[...], preferred_element_type=jnp.float32)
    h1 = jnp.maximum(h1 + b1_ref[...], 0.0)                        # [TILE_B, 128] f32
    # fc2 (bf16 MXU, f32 accumulate) + bias + ReLU in f32
    h2 = jnp.dot(h1.astype(jnp.bfloat16), w2_ref[...],
                 preferred_element_type=jnp.float32)
    h2 = jnp.maximum(h2 + b2_ref[...], 0.0)                        # [TILE_B, 64] f32
    # fc3 (N=1): contract the feature dim so the result is emitted lane-dense as
    # a [1, TILE_B] slab directly (no [TILE_B] -> [1, TILE_B] relayout).
    r = lax.dot_general(w3_ref[...], h2,
                        dimension_numbers=(((1,), (1,)), ((), ())),
                        preferred_element_type=jnp.float32)        # [1, TILE_B] f32
    out_ref[...] = (r + b3_ref[...]).astype(out_ref.dtype)


def _round_up(x, m):
    return ((x + m - 1) // m) * m


def _choose_tile_b(batch, d, vmem_budget_bytes=8 << 20):
    """Pick tile_b: num_tiles-first (>=2 when there is enough work, for v7x megacore),
    rounded to 128, capped by a D-aware per-row VMEM footprint estimate."""
    # Per-row bytes: double-buffered f32 x tile + bf16 copy, f32 h1/h2 (+ bf16 h1
    # for fc2), double-buffered f32 out slab. Weights are tiny and ignored here.
    per_row = 2 * d * 4 + d * 2 + 128 * 4 + 128 * 2 + 64 * 4 + 2 * 4
    cap = (vmem_budget_bytes // per_row) // 128 * 128
    cap = int(min(max(cap, 128), 16384))
    # At least 2 grid steps once there is more than one 128-row block of work,
    # so dimension_semantics=("parallel",) can shard across both v7x TensorCores.
    num_tiles = max(pl.cdiv(batch, cap), 2 if batch > 128 else 1)
    tile_b = min(cap, _round_up(pl.cdiv(batch, num_tiles), 128))
    return max(128, tile_b)


def prepare_params(params):
    """Cast / reshape weights once (hoisted out of the per-call wrapper)."""
    w1, b1, w2, b2, w3, b3 = params
    return (w1.astype(jnp.bfloat16),
            b1.reshape(1, -1).astype(jnp.float32),
            w2.astype(jnp.bfloat16),
            b2.reshape(1, -1).astype(jnp.float32),
            w3.reshape(1, -1).astype(jnp.float32),   # [1, 64] row for fc3 contraction
            b3.reshape(1, 1).astype(jnp.float32))


def reward_predictor_forward(x, prepared_params, tile_b=None):
    """x: [B, D] f32. prepared_params: output of prepare_params()."""
    w1_b, b1, w2_b, b2, w3_row, b3_s = prepared_params
    B, D = x.shape
    if tile_b is None:
        tile_b = _choose_tile_b(B, D)
    num_tiles = pl.cdiv(B, tile_b)

    n1 = w1_b.shape[1]
    n2 = w2_b.shape[1]
    cost = pl.CostEstimate(
        flops=2 * B * (D * n1 + n1 * n2 + n2),
        transcendentals=0,
        bytes_accessed=B * D * x.dtype.itemsize
        + (D * n1 + n1 * n2) * 2 + (n1 + n2 + n2 + 1) * 4 + B * 4,
    )

    full = lambda i: (0, 0)                                        # weights stay resident
    out = pl.pallas_call(
        reward_predictor_kernel,
        out_shape=jax.ShapeDtypeStruct((1, B), jnp.float32),
        grid=(num_tiles,),
        in_specs=[
            pl.BlockSpec((tile_b, D), lambda i: (i, 0)),           # x tile (partial last ok)
            pl.BlockSpec(w1_b.shape, full),
            pl.BlockSpec(b1.shape, full),
            pl.BlockSpec(w2_b.shape, full),
            pl.BlockSpec(b2.shape, full),
            pl.BlockSpec(w3_row.shape, full),
            pl.BlockSpec(b3_s.shape, full),
        ],
        out_specs=pl.BlockSpec((1, tile_b), lambda i: (0, i)),     # lane-dense slab
        compiler_params=pltpu.CompilerParams(
            dimension_semantics=("parallel",)),
        cost_estimate=cost,
    )(x, w1_b, b1, w2_b, b2, w3_row, b3_s)

    return out.reshape(B, 1)


def init_params(key, input_dim):
    """Deterministic synthetic init (PyTorch-Linear-like uniform ranges)."""
    ks = jax.random.split(key, 6)

    def uniform(k, shape, fan_in):
        bound = 1.0 / jnp.sqrt(fan_in)
        return jax.random.uniform(k, shape, jnp.float32, -bound, bound)

    # Weights stored as [in, out] (transposed vs. PyTorch's [out, in]).
    w1 = uniform(ks[0], (input_dim, 128), input_dim)
    b1 = uniform(ks[1], (1, 128), input_dim)
    w2 = uniform(ks[2], (128, 64), 128)
    b2 = uniform(ks[3], (1, 64), 128)
    w3 = uniform(ks[4], (64, 1), 64)
    b3 = uniform(ks[5], (1, 1), 64)
    return (w1, b1, w2, b2, w3, b3)


def ref_forward(x, params):
    """Pure-JAX reference with the same bf16-input / f32-accumulate numerics."""
    w1, b1, w2, b2, w3, b3 = params
    h1 = jnp.maximum(jnp.dot(x.astype(jnp.bfloat16), w1.astype(jnp.bfloat16),
                             preferred_element_type=jnp.float32) + b1, 0.0)
    h2 = jnp.maximum(jnp.dot(h1.astype(jnp.bfloat16), w2.astype(jnp.bfloat16),
                             preferred_element_type=jnp.float32) + b2, 0.0)
    return jnp.dot(h2, w3, preferred_element_type=jnp.float32) + b3


# TODO(synk): train_model (optimizer step / BCE-on-sigmoid preference loss) is a
# training loop, not part of the module's forward pass, and is not implemented here.

if __name__ == "__main__":
    key = jax.random.PRNGKey(0)
    k_x, k_p, k_x2 = jax.random.split(key, 3)

    B, INPUT_DIM = 2, 32
    x = jax.random.normal(k_x, (B, INPUT_DIM), dtype=jnp.float32)
    params = init_params(k_p, INPUT_DIM)
    prepared = prepare_params(params)

    out = reward_predictor_forward(x, prepared)
    jax.block_until_ready(out)
    ref = ref_forward(x, params)
    assert out.shape == (B, 1)
    assert jnp.allclose(out, ref, atol=1e-3, rtol=1e-3), "mismatch vs reference (B=2)"

    # Multi-tile sanity check: B not a multiple of the tile, grid of 3 steps,
    # partial last block handled by Pallas (no wrapper pad).
    B2 = 300
    x2 = jax.random.normal(k_x2, (B2, INPUT_DIM), dtype=jnp.float32)
    out2 = reward_predictor_forward(x2, prepared, tile_b=128)
    jax.block_until_ready(out2)
    ref2 = ref_forward(x2, params)
    assert out2.shape == (B2, 1)
    assert jnp.allclose(out2, ref2, atol=1e-3, rtol=1e-3), "mismatch vs reference (B=300)"

    # Default tile policy on the larger batch (2 grid steps, tile rounded to 128).
    out3 = reward_predictor_forward(x2, prepared)
    jax.block_until_ready(out3)
    assert jnp.allclose(out3, ref2, atol=1e-3, rtol=1e-3), "mismatch vs reference (auto tile)"

    print("KERNEL_OK")
</pallas_src>

<mosaic_0001>
module attributes {stable_mosaic.version = 11 : i64} {
  func.func @reward_predictor_kernel(%arg0: i32, %arg1: memref<128x32xf32, #tpu.memory_space<vmem>>, %arg2: memref<32x128xbf16, #tpu.memory_space<vmem>>, %arg3: memref<1x128xf32, #tpu.memory_space<vmem>>, %arg4: memref<128x64xbf16, #tpu.memory_space<vmem>>, %arg5: memref<1x64xf32, #tpu.memory_space<vmem>>, %arg6: memref<1x64xf32, #tpu.memory_space<vmem>>, %arg7: memref<1x1xf32, #tpu.memory_space<vmem>>, %arg8: memref<1x128xf32, #tpu.memory_space<vmem>>) attributes {dimension_semantics = [#tpu.dimension_semantics<parallel>], iteration_bounds = array<i64: 1>, scalar_prefetch = 0 : i64, scratch_operands = 0 : i64, tpu.core_type = #tpu.core_type<tc>, window_params = [{transform_indices = @transform_0, window_bounds = array<i64: 128, 32>}, {pipeline_mode = #tpu.pipeline_mode<synchronous>, transform_indices = @transform_1, window_bounds = array<i64: 32, 128>}, {pipeline_mode = #tpu.pipeline_mode<synchronous>, transform_indices = @transform_2, window_bounds = array<i64: 1, 128>}, {pipeline_mode = #tpu.pipeline_mode<synchronous>, transform_indices = @transform_3, window_bounds = array<i64: 128, 64>}, {pipeline_mode = #tpu.pipeline_mode<synchronous>, transform_indices = @transform_4, window_bounds = array<i64: 1, 64>}, {pipeline_mode = #tpu.pipeline_mode<synchronous>, transform_indices = @transform_5, window_bounds = array<i64: 1, 64>}, {pipeline_mode = #tpu.pipeline_mode<synchronous>, transform_indices = @transform_6, window_bounds = array<i64: 1, 1>}, {transform_indices = @transform_7, window_bounds = array<i64: 1, 128>}]} {
    %c0 = arith.constant 0 : index
    %c0_0 = arith.constant 0 : index
    %0 = vector.load %arg1[%c0, %c0_0] : memref<128x32xf32, #tpu.memory_space<vmem>>, vector<128x32xf32>
    %1 = arith.truncf %0 : vector<128x32xf32> to vector<128x32xbf16>
    %c0_1 = arith.constant 0 : index
    %c0_2 = arith.constant 0 : index
    %2 = vector.load %arg2[%c0_1, %c0_2] : memref<32x128xbf16, #tpu.memory_space<vmem>>, vector<32x128xbf16>
    %cst = arith.constant dense<0.000000e+00> : vector<128x128xf32>
    %3 = tpu.matmul %1, %2, %cst {dimension_numbers = #tpu.dot_dimension_numbers<[1], [0], [0], [1], [0, 0, 1, 1], [], []>} : vector<128x32xbf16>, vector<32x128xbf16>, vector<128x128xf32> -> vector<128x128xf32>
    %c0_3 = arith.constant 0 : index
    %c0_4 = arith.constant 0 : index
    %4 = vector.load %arg3[%c0_3, %c0_4] : memref<1x128xf32, #tpu.memory_space<vmem>>, vector<1x128xf32>
    %5 = vector.broadcast %4 : vector<1x128xf32> to vector<128x128xf32>
    %6 = arith.addf %3, %5 : vector<128x128xf32>
    %cst_5 = arith.constant 0.000000e+00 : f32
    %7 = vector.broadcast %cst_5 : f32 to vector<128x128xf32>
    %8 = arith.maximumf %6, %7 : vector<128x128xf32>
    %9 = arith.truncf %8 : vector<128x128xf32> to vector<128x128xbf16>
    %c0_6 = arith.constant 0 : index
    %c0_7 = arith.constant 0 : index
    %10 = vector.load %arg4[%c0_6, %c0_7] : memref<128x64xbf16, #tpu.memory_space<vmem>>, vector<128x64xbf16>
    %cst_8 = arith.constant dense<0.000000e+00> : vector<128x64xf32>
    %11 = tpu.matmul %9, %10, %cst_8 {dimension_numbers = #tpu.dot_dimension_numbers<[1], [0], [0], [1], [0, 0, 1, 1], [], []>} : vector<128x128xbf16>, vector<128x64xbf16>, vector<128x64xf32> -> vector<128x64xf32>
    %c0_9 = arith.constant 0 : index
    %c0_10 = arith.constant 0 : index
    %12 = vector.load %arg5[%c0_9, %c0_10] : memref<1x64xf32, #tpu.memory_space<vmem>>, vector<1x64xf32>
    %13 = vector.broadcast %12 : vector<1x64xf32> to vector<128x64xf32>
    %14 = arith.addf %11, %13 : vector<128x64xf32>
    %cst_11 = arith.constant 0.000000e+00 : f32
    %15 = vector.broadcast %cst_11 : f32 to vector<128x64xf32>
    %16 = arith.maximumf %14, %15 : vector<128x64xf32>
    %c0_12 = arith.constant 0 : index
    %c0_13 = arith.constant 0 : index
    %17 = vector.load %arg6[%c0_12, %c0_13] : memref<1x64xf32, #tpu.memory_space<vmem>>, vector<1x64xf32>
    %cst_14 = arith.constant dense<0.000000e+00> : vector<1x128xf32>
    %18 = tpu.matmul %17, %16, %cst_14 {dimension_numbers = #tpu.dot_dimension_numbers<[1], [1], [0], [0], [0, 0, 1, 0], [], []>} : vector<1x64xf32>, vector<128x64xf32>, vector<1x128xf32> -> vector<1x128xf32>
    %c0_15 = arith.constant 0 : index
    %c0_16 = arith.constant 0 : index
    %19 = vector.load %arg7[%c0_15, %c0_16] : memref<1x1xf32, #tpu.memory_space<vmem>>, vector<1x1xf32>
    %20 = vector.broadcast %19 : vector<1x1xf32> to vector<1x128xf32>
    %21 = arith.addf %18, %20 : vector<1x128xf32>
    %c0_17 = arith.constant 0 : index
    %c0_18 = arith.constant 0 : index
    %22 = vector.load %arg8[%c0_17, %c0_18] : memref<1x128xf32, #tpu.memory_space<vmem>>, vector<1x128xf32>
    tpu.vector_store %arg8[%c0_17, %c0_18], %21 {strides = array<i32>} : memref<1x128xf32, #tpu.memory_space<vmem>>, vector<1x128xf32>,
    return
  }
  func.func @transform_0(%arg0: i32) -> (i32, i32) {
    %c0_i32 = arith.constant 0 : i32
    %c0_i32_0 = arith.constant 0 : i32
    return %arg0, %c0_i32 : i32, i32
  }
  func.func @transform_1(%arg0: i32) -> (i32, i32) {
    %c0_i32 = arith.constant 0 : i32
    %c0_i32_0 = arith.constant 0 : i32
    %c0_i32_1 = arith.constant 0 : i32
    return %c0_i32, %c0_i32_0 : i32, i32
  }
  func.func @transform_2(%arg0: i32) -> (i32, i32) {
    %c0_i32 = arith.constant 0 : i32
    %c0_i32_0 = arith.constant 0 : i32
    %c0_i32_1 = arith.constant 0 : i32
    return %c0_i32, %c0_i32_0 : i32, i32
  }
  func.func @transform_3(%arg0: i32) -> (i32, i32) {
    %c0_i32 = arith.constant 0 : i32
    %c0_i32_0 = arith.constant 0 : i32
    %c0_i32_1 = arith.constant 0 : i32
    return %c0_i32, %c0_i32_0 : i32, i32
  }
  func.func @transform_4(%arg0: i32) -> (i32, i32) {
    %c0_i32 = arith.constant 0 : i32
    %c0_i32_0 = arith.constant 0 : i32
    %c0_i32_1 = arith.constant 0 : i32
    return %c0_i32, %c0_i32_0 : i32, i32
  }
  func.func @transform_5(%arg0: i32) -> (i32, i32) {
    %c0_i32 = arith.constant 0 : i32
    %c0_i32_0 = arith.constant 0 : i32
    %c0_i32_1 = arith.constant 0 : i32
    return %c0_i32, %c0_i32_0 : i32, i32
  }
  func.func @transform_6(%arg0: i32) -> (i32, i32) {
    %c0_i32 = arith.constant 0 : i32
    %c0_i32_0 = arith.constant 0 : i32
    %c0_i32_1 = arith.constant 0 : i32
    return %c0_i32, %c0_i32_0 : i32, i32
  }
  func.func @transform_7(%arg0: i32) -> (i32, i32) {
    %c0_i32 = arith.constant 0 : i32
    %c0_i32_0 = arith.constant 0 : i32
    return %c0_i32, %arg0 : i32, i32
  }
}

</mosaic_0001>

<llo_original>
// kernel: tpu_custom_call.1
$region0: #{tpu_custom_call.1}
  #allocation0 [shape = 'u32[]', space=smem, size = 0x4, offset = 0x4, fixed_abs, tag = 'smem constant byte address 0x4 - core index']
  #allocation1 [shape = 'u32[72,128]{1,0:T(1,128)}', space=vmem, size = 0x9000, scoped, tag = 'internal scratch']
  #allocation2 [shape = 'f32[1,1]{1,0:T(1,128)S(1)}', space=vmem, size = 0x200, scoped, tag = 'scoped memory for tpu_custom_call.1']
  %s0 = inlined_call_operand.vmem [shape: f32[2,32], index: 0, kind: input, shape index: {}]
  %s1 = inlined_call_operand.vmem [shape: bf16[32,128], index: 1, kind: input, shape index: {}]
  %s2 = inlined_call_operand.vmem [shape: f32[1,128], index: 2, kind: input, shape index: {}]
  %s3 = inlined_call_operand.vmem [shape: bf16[128,64], index: 3, kind: input, shape index: {}]
  %s4 = inlined_call_operand.vmem [shape: f32[1,64], index: 4, kind: input, shape index: {}]
  %s5 = inlined_call_operand.vmem [shape: f32[1,64], index: 5, kind: input, shape index: {}]
  %s6 = inlined_call_operand.<no memory space> [shape: f32[1,1], index: 6, kind: input, shape index: {}]
  %s7 = inlined_call_operand.hbm [shape: f32[1,2], index: 7, kind: output, shape index: {}]
  %s8 = sld [smem:[#allocation0]]
  $region38: #{tpu_custom_call.1} parent=0
    _
  %s10 = ssub.s32 1, %s8
  %s11 = scalar_select 0, %s10, %s8
  %v12 = vstv %s6
  %13 = vst [vmem:[#allocation2] sm:$0x1] %v12
  $region1: #{tpu_custom_call.1} parent=0
    #allocation3 [shape = 'u8[512]{0}', space=vmem, size = 0x400, scoped, tag = 'output window, operand 0, single buffered']
    #allocation4 [shape = 's32[1]{0}', space=sflag, size = 0x4, scoped, tag = 'scoped memory for tpu_custom_call.1']
    %14 = vsyncpa [#allocation4], 0
    // Predicated region
    $region2: #{tpu_custom_call.1} parent=1 // pred_check
      _
    $region3: #{tpu_custom_call.1} parent=1 // pred_check_branch
      %16 = sbr.rel (0) target = $region5
    $region4: #{tpu_custom_call.1} parent=1 // pred_region
      _
    $region5: #{tpu_custom_call.1} parent=1 // pred_fallthru
      _
    // Predicated region
    $region6: #{tpu_custom_call.1} parent=1 // pred_check
      _
    $region7: #{tpu_custom_call.1} parent=1 // pred_check_branch
      %18 = sbr.rel (0) target = $region9
    $region8: #{tpu_custom_call.1} parent=1 // pred_region
      _
    $region9: #{tpu_custom_call.1} parent=1 // pred_fallthru
      _
    // Predicated region
    $region10: #{tpu_custom_call.1} parent=1 // pred_check
      _
    $region11: #{tpu_custom_call.1} parent=1 // pred_check_branch
      %20 = sbr.rel (0) target = $region13
    $region12: #{tpu_custom_call.1} parent=1 // pred_region
      _
    $region13: #{tpu_custom_call.1} parent=1 // pred_fallthru
      _
    // Predicated region
    $region14: #{tpu_custom_call.1} parent=1 // pred_check
      _
    $region15: #{tpu_custom_call.1} parent=1 // pred_check_branch
      %22 = sbr.rel (0) target = $region17
    $region16: #{tpu_custom_call.1} parent=1 // pred_region
      _
    $region17: #{tpu_custom_call.1} parent=1 // pred_fallthru
      _
    // Predicated region
    $region18: #{tpu_custom_call.1} parent=1 // pred_check
      _
    $region19: #{tpu_custom_call.1} parent=1 // pred_check_branch
      %24 = sbr.rel (0) target = $region21
    $region20: #{tpu_custom_call.1} parent=1 // pred_region
      _
    $region21: #{tpu_custom_call.1} parent=1 // pred_fallthru
      _
    // Predicated region
    $region22: #{tpu_custom_call.1} parent=1 // pred_check
      _
    $region23: #{tpu_custom_call.1} parent=1 // pred_check_branch
      %26 = sbr.rel (0) target = $region25
    $region24: #{tpu_custom_call.1} parent=1 // pred_region
      _
    $region25: #{tpu_custom_call.1} parent=1 // pred_fallthru
      _
    // Predicated region
    $region26: #{tpu_custom_call.1} parent=1 // pred_check
      _
    $region27: #{tpu_custom_call.1} parent=1 // pred_check_branch
      %28 = sbr.rel (0) target = $region29
    $region28: #{tpu_custom_call.1} parent=1 // pred_region
      _
    $region29: #{tpu_custom_call.1} parent=1 // pred_fallthru
      _
    %v30 = vld [vmem:[%s0] sm:$0xff]
    %v31 = vld [vmem:[%s0 + $0x8] sm:$0xff]
    %v32 = vld [vmem:[%s0 + $0x10] sm:$0xff]
    %v33 = vld [vmem:[%s0 + $0x18] sm:$0xff]
    %v34 = vld [vmem:[%s0 + $0x20] sm:$0xff]
    %v35 = vld [vmem:[%s0 + $0x28] sm:$0xff]
    %v36 = vld [vmem:[%s0 + $0x30] sm:$0xff]
    %v37 = vld [vmem:[%s0 + $0x38] sm:$0xff]
    %v38 = vld [vmem:[%s0 + $0x40] sm:$0xff]
    %v39 = vld [vmem:[%s0 + $0x48] sm:$0xff]
    %v40 = vld [vmem:[%s0 + $0x50] sm:$0xff]
    %v41 = vld [vmem:[%s0 + $0x58] sm:$0xff]
    %v42 = vld [vmem:[%s0 + $0x60] sm:$0xff]
    %v43 = vld [vmem:[%s0 + $0x68] sm:$0xff]
    %v44 = vld [vmem:[%s0 + $0x70] sm:$0xff]
    %v45 = vld [vmem:[%s0 + $0x78] sm:$0xff]
    %v46 = vpack.c.bf16 %v31, %v30
    %v47 = vpack.c.bf16 %v33, %v32
    %v48 = vpack.c.bf16 %v35, %v34
    %v49 = vpack.c.bf16 %v37, %v36
    %v50 = vpack.c.bf16 %v39, %v38
    %v51 = vpack.c.bf16 %v41, %v40
    %v52 = vpack.c.bf16 %v43, %v42
    %v53 = vpack.c.bf16 %v45, %v44
    %v54 = vld [vmem:[%s1] sm:$0xf]
    %v55 = vld [vmem:[%s1 + $0x4] sm:$0xf]
    %v56 = vld [vmem:[%s1 + $0x8] sm:$0xf]
    %v57 = vld [vmem:[%s1 + $0xc] sm:$0xf]
    %v58 = vld [vmem:[%s2] sm:$0x1]
    %v60 = vperm.slane %v58, 0
    %v66 = vunpack.c.l.b16 %v54
    %v67 = vunpack.c.l.b16 %v55
    %v68 = vunpack.c.l.b16 %v56
    %v69 = vunpack.c.l.b16 %v57
    %v70 = vpack.c.b16 %v67, %v66
    %v71 = vpack.c.b16 %v69, %v68
    %vm74 = vcmask 261120
    %v76 = vsel %vm74, %v46, 0
    %v79 = vsel %vm74, %v47, 0
    %v82 = vsel %vm74, %v48, 0
    %v85 = vsel %vm74, %v49, 0
    %v88 = vsel %vm74, %v50, 0
    %v91 = vsel %vm74, %v51, 0
    %v94 = vsel %vm74, %v52, 0
    %v97 = vsel %vm74, %v53, 0
    %99 = vmatpush.bf16.msra.mxu0 0
    %100 = vmatpush.bf16.msra.mxu0 0
    %101 = vmatpush.bf16.msra.mxu0 0
    %102 = vmatpush.bf16.msra.mxu0 0
    %103 = vmatpush.bf16.msra.mxu0 0
    %104 = vmatpush.bf16.msra.mxu0 0
    %105 = vmatpush.bf16.msra.mxu0 %v71
    %106 = vmatpush.bf16.msra.mxu0 %v70
    %107 = vmatmul.bf16.gmra.mxu0 %v76
    %v108 = vpop.f32.mrf.mxu0
    %v109 = vadd.f32 %v60, %v108
    %v110 = vpop.f32.mrf.mxu0
    %v111 = vadd.f32 %v60, %v110
    %112 = vmatmul.bf16.gmra.mxu0 %v79
    %v113 = vpop.f32.mrf.mxu0
    %v114 = vadd.f32 %v60, %v113
    %v115 = vpop.f32.mrf.mxu0
    %v116 = vadd.f32 %v60, %v115
    %117 = vmatmul.bf16.gmra.mxu0 %v82
    %v118 = vpop.f32.mrf.mxu0
    %v119 = vadd.f32 %v60, %v118
    %v120 = vpop.f32.mrf.mxu0
    %v121 = vadd.f32 %v60, %v120
    %122 = vmatmul.bf16.gmra.mxu0 %v85
    %v123 = vpop.f32.mrf.mxu0
    %v124 = vadd.f32 %v60, %v123
    %v125 = vpop.f32.mrf.mxu0
    %v126 = vadd.f32 %v60, %v125
    %127 = vmatmul.bf16.gmra.mxu0 %v88
    %v128 = vpop.f32.mrf.mxu0
    %v129 = vadd.f32 %v60, %v128
    %v130 = vpop.f32.mrf.mxu0
    %v131 = vadd.f32 %v60, %v130
    %132 = vmatmul.bf16.gmra.mxu0 %v91
    %v133 = vpop.f32.mrf.mxu0
    %v134 = vadd.f32 %v60, %v133
    %v135 = vpop.f32.mrf.mxu0
    %v136 = vadd.f32 %v60, %v135
    %137 = vmatmul.bf16.gmra.mxu0 %v94
    %v138 = vpop.f32.mrf.mxu0
    %v139 = vadd.f32 %v60, %v138
    %v140 = vpop.f32.mrf.mxu0
    %v141 = vadd.f32 %v60, %v140
    %142 = vmatmul.bf16.gmra.mxu0 %v97
    %v143 = vpop.f32.mrf.mxu0
    %v144 = vadd.f32 %v60, %v143
    %v145 = vpop.f32.mrf.mxu0
    %v146 = vadd.f32 %v60, %v145
    %147 = vdwg.mxu0
    %v148 = vmax.f32 %v109, 0.0
    %v149 = vmax.f32 %v111, 0.0
    %v150 = vmax.f32 %v114, 0.0
    %v151 = vmax.f32 %v116, 0.0
    %v152 = vmax.f32 %v119, 0.0
    %v153 = vmax.f32 %v121, 0.0
    %v154 = vmax.f32 %v124, 0.0
    %v155 = vmax.f32 %v126, 0.0
    %v156 = vmax.f32 %v129, 0.0
    %v157 = vmax.f32 %v131, 0.0
    %v158 = vmax.f32 %v134, 0.0
    %v159 = vmax.f32 %v136, 0.0
    %v160 = vmax.f32 %v139, 0.0
    %v161 = vmax.f32 %v141, 0.0
    %v162 = vmax.f32 %v144, 0.0
    %v163 = vmax.f32 %v146, 0.0
    %v164 = vpack.c.bf16 %v149, %v148
    %v165 = vpack.c.bf16 %v151, %v150
    %v166 = vpack.c.bf16 %v153, %v152
    %v167 = vpack.c.bf16 %v155, %v154
    %v168 = vpack.c.bf16 %v157, %v156
    %v169 = vpack.c.bf16 %v159, %v158
    %v170 = vpack.c.bf16 %v161, %v160
    %v171 = vpack.c.bf16 %v163, %v162
    %v172 = vld [vmem:[%s3] sm:$0xf]
    %v173 = vld [vmem:[%s3 + $0x4] sm:$0xf]
    %v174 = vld [vmem:[%s3 + $0x8] sm:$0xf]
    %v175 = vld [vmem:[%s3 + $0xc] sm:$0xf]
    %v176 = vld [vmem:[%s3 + $0x10] sm:$0xf]
    %v177 = vld [vmem:[%s3 + $0x14] sm:$0xf]
    %v178 = vld [vmem:[%s3 + $0x18] sm:$0xf]
    %v179 = vld [vmem:[%s3 + $0x1c] sm:$0xf]
    %v180 = vld [vmem:[%s3 + $0x20] sm:$0xf]
    %v181 = vld [vmem:[%s3 + $0x24] sm:$0xf]
    %v182 = vld [vmem:[%s3 + $0x28] sm:$0xf]
    %v183 = vld [vmem:[%s3 + $0x2c] sm:$0xf]
    %v184 = vld [vmem:[%s3 + $0x30] sm:$0xf]
    %v185 = vld [vmem:[%s3 + $0x34] sm:$0xf]
    %v186 = vld [vmem:[%s3 + $0x38] sm:$0xf]
    %v187 = vld [vmem:[%s3 + $0x3c] sm:$0xf]
    %v188 = vld [vmem:[%s4] sm:$0x1]
    %v190 = vperm.slane %v188, 0
    %v208 = vunpack.c.l.b16 %v172
    %v209 = vunpack.c.l.b16 %v173
    %v210 = vunpack.c.l.b16 %v174
    %v211 = vunpack.c.l.b16 %v175
    %v212 = vunpack.c.l.b16 %v176
    %v213 = vunpack.c.l.b16 %v177
    %v214 = vunpack.c.l.b16 %v178
    %v215 = vunpack.c.l.b16 %v179
    %v216 = vunpack.c.l.b16 %v180
    %v217 = vunpack.c.l.b16 %v181
    %v218 = vunpack.c.l.b16 %v182
    %v219 = vunpack.c.l.b16 %v183
    %v220 = vunpack.c.l.b16 %v184
    %v221 = vunpack.c.l.b16 %v185
    %v222 = vunpack.c.l.b16 %v186
    %v223 = vunpack.c.l.b16 %v187
    %v224 = vpack.c.b16 %v209, %v208
    %v225 = vpack.c.b16 %v211, %v210
    %v226 = vpack.c.b16 %v213, %v212
    %v227 = vpack.c.b16 %v215, %v214
    %v228 = vpack.c.b16 %v217, %v216
    %v229 = vpack.c.b16 %v219, %v218
    %v230 = vpack.c.b16 %v221, %v220
    %v231 = vpack.c.b16 %v223, %v222
    %240 = vmatpush.bf16.msra.mxu0 %v231
    %241 = vmatpush.bf16.msra.mxu0 %v230
    %242 = vmatpush.bf16.msra.mxu0 %v229
    %243 = vmatpush.bf16.msra.mxu0 %v228
    %244 = vmatpush.bf16.msra.mxu0 %v227
    %245 = vmatpush.bf16.msra.mxu0 %v226
    %246 = vmatpush.bf16.msra.mxu0 %v225
    %247 = vmatpush.bf16.msra.mxu0 %v224
    %248 = vmatmul.bf16.gmra.mxu0 %v164
    %v249 = vpop.f32.mrf.mxu0
    %v250 = vadd.f32 %v190, %v249
    %v251 = vpop.f32.mrf.mxu0
    %v252 = vadd.f32 %v190, %v251
    %253 = vmatmul.bf16.gmra.mxu0 %v165
    %v254 = vpop.f32.mrf.mxu0
    %v255 = vadd.f32 %v190, %v254
    %v256 = vpop.f32.mrf.mxu0
    %v257 = vadd.f32 %v190, %v256
    %258 = vmatmul.bf16.gmra.mxu0 %v166
    %v259 = vpop.f32.mrf.mxu0
    %v260 = vadd.f32 %v190, %v259
    %v261 = vpop.f32.mrf.mxu0
    %v262 = vadd.f32 %v190, %v261
    %263 = vmatmul.bf16.gmra.mxu0 %v167
    %v264 = vpop.f32.mrf.mxu0
    %v265 = vadd.f32 %v190, %v264
    %v266 = vpop.f32.mrf.mxu0
    %v267 = vadd.f32 %v190, %v266
    %268 = vmatmul.bf16.gmra.mxu0 %v168
    %v269 = vpop.f32.mrf.mxu0
    %v270 = vadd.f32 %v190, %v269
    %v271 = vpop.f32.mrf.mxu0
    %v272 = vadd.f32 %v190, %v271
    %273 = vmatmul.bf16.gmra.mxu0 %v169
    %v274 = vpop.f32.mrf.mxu0
    %v275 = vadd.f32 %v190, %v274
    %v276 = vpop.f32.mrf.mxu0
    %v277 = vadd.f32 %v190, %v276
    %278 = vmatmul.bf16.gmra.mxu0 %v170
    %v279 = vpop.f32.mrf.mxu0
    %v280 = vadd.f32 %v190, %v279
    %v281 = vpop.f32.mrf.mxu0
    %v282 = vadd.f32 %v190, %v281
    %283 = vmatmul.bf16.gmra.mxu0 %v171
    %v284 = vpop.f32.mrf.mxu0
    %v285 = vadd.f32 %v190, %v284
    %v286 = vpop.f32.mrf.mxu0
    %v287 = vadd.f32 %v190, %v286
    %288 = vdwg.mxu0
    %v289 = vmax.f32 %v250, 0.0
    %v290 = vmax.f32 %v252, 0.0
    %v291 = vmax.f32 %v255, 0.0
    %v292 = vmax.f32 %v257, 0.0
    %v293 = vmax.f32 %v260, 0.0
    %v294 = vmax.f32 %v262, 0.0
    %v295 = vmax.f32 %v265, 0.0
    %v296 = vmax.f32 %v267, 0.0
    %v297 = vmax.f32 %v270, 0.0
    %v298 = vmax.f32 %v272, 0.0
    %v299 = vmax.f32 %v275, 0.0
    %v300 = vmax.f32 %v277, 0.0
    %v301 = vmax.f32 %v280, 0.0
    %v302 = vmax.f32 %v282, 0.0
    %v303 = vmax.f32 %v285, 0.0
    %v304 = vmax.f32 %v287, 0.0
    %v305 = vld [vmem:[%s5] sm:$0x1]
    %v306 = vld [vmem:[#allocation2] sm:$0x1]
    %308 = vset.pattern.permute.xlu0 0
    %309 = vperm.xlu0 %308, %v306
    %v310 = vpop.permute.xlu0 %309
    %v312 = vperm.slane %v310, 0
    %vm313 = vcmask 523264
    %v315 = vsel %vm313, %v305, 0
    %v318 = vsel %vm313, %v289, 0
    %v321 = vsel %vm313, %v290, 0
    %v324 = vsel %vm313, %v291, 0
    %v327 = vsel %vm313, %v292, 0
    %v330 = vsel %vm313, %v293, 0
    %v333 = vsel %vm313, %v294, 0
    %v336 = vsel %vm313, %v295, 0
    %v339 = vsel %vm313, %v296, 0
    %v342 = vsel %vm313, %v297, 0
    %v345 = vsel %vm313, %v298, 0
    %v348 = vsel %vm313, %v299, 0
    %v351 = vsel %vm313, %v300, 0
    %v354 = vsel %vm313, %v301, 0
    %v357 = vsel %vm313, %v302, 0
    %v360 = vsel %vm313, %v303, 0
    %v363 = vsel %vm313, %v304, 0
    %365 = vmatpush.xpose.msra.mxu0 %v363
    %366 = vmatpush.xpose.msra.mxu0 %v360
    %367 = vmatpush.xpose.msra.mxu0 %v357
    %368 = vmatpush.xpose.msra.mxu0 %v354
    %369 = vmatpush.xpose.msra.mxu0 %v351
    %370 = vmatpush.xpose.msra.mxu0 %v348
    %371 = vmatpush.xpose.msra.mxu0 %v345
    %372 = vmatpush.xpose.msra.mxu0 %v342
    %373 = vmatpush.xpose.msra.mxu0 %v339
    %374 = vmatpush.xpose.msra.mxu0 %v336
    %375 = vmatpush.xpose.msra.mxu0 %v333
    %376 = vmatpush.xpose.msra.mxu0 %v330
    %377 = vmatpush.xpose.msra.mxu0 %v327
    %378 = vmatpush.xpose.msra.mxu0 %v324
    %379 = vmatpush.xpose.msra.mxu0 %v321
    %380 = vmatpush.xpose.msra.mxu0 %v318
    %381 = vmatmul.f32.gmra.mxu0 %v315
    %v382 = vpop.f32.mrf.mxu0
    %v383 = vadd.f32 %v312, %v382
    %384 = vdwg.mxu0
    %385 = vst [vmem:[#allocation3] sm:$0x1] %v383
    // Predicated region
    $region30: #{tpu_custom_call.1} parent=1 // pred_check
      _
    $region31: #{tpu_custom_call.1} parent=1 // pred_check_branch
      %387 = sbr.rel (0) target = $region33
    $region32: #{tpu_custom_call.1} parent=1 // pred_region
      %389 = vsyncadd [#allocation4], 0
      %s391 = sshll.u32 [#allocation3], 4
      %s392 = int_to_ptr.vmem [resolvable:$true] %s391
      %s393 = sshll.u32 %s7, 4
      %s394 = int_to_ptr.hbm [resolvable:$true] %s393
      %396 = dma.vmem_to_hbm [thread:$0]  %s392, 16, %s394, [#allocation4]
    $region33: #{tpu_custom_call.1} parent=1 // pred_fallthru
      _
    // Predicated region
    $region34: #{tpu_custom_call.1} parent=1 // pred_check
      _
    $region35: #{tpu_custom_call.1} parent=1 // pred_check_branch
      %398 = sbr.rel (0) target = $region37
    $region36: #{tpu_custom_call.1} parent=1 // pred_region
      %400 = dma.done [#allocation4], 16
    $region37: #{tpu_custom_call.1} parent=1 // pred_fallthru
      _
    %401 = vsyncpa [#allocation4], 1

</llo_original>
